<compile_context>
chip_gen: v5e
topology: v5e:2x2
jax: 0.10.0
libtpu: 0.0.40
codegen_flags: <defaults>
</compile_context>

<pallas_src>
import functools

import numpy as np
import jax
import jax.numpy as jnp
from jax import lax
from jax.experimental import pallas as pl
from jax.experimental.pallas import tpu as pltpu


_MAX_UNROLL_LAYERS = 8   # beyond this, use lax.fori_loop instead of unrolling


def _eikonal_kernel(num_layers, H, H_pad, W_valid, uniform, uniform_all,
                    w_ref, t_ref, sos_ref, out_ref):
    """Processes one (Bblk*H_pad, W_pad) slab of batch-flattened rows.

    w_ref   : SMEM (scalar prefetch), f32[num_layers * 9], row-major 3x3 taps
    t_ref   : VMEM, f32[Bblk*H_pad, W_pad]
    sos_ref : VMEM, f32[Bblk*H_pad, W_pad]
    out_ref : VMEM, f32[Bblk*H_pad, W_pad]
    """
    T = t_ref[...]
    slowness = 1.0 / sos_ref[...]          # exact reciprocal (tolerance-critical)
    R, Wp = T.shape

    # ---- rank-1 boundary masks, hoisted out of the layer loop ---------------
    li = lax.broadcasted_iota(jnp.int32, (R, 1), 0) % H_pad       # local row
    col = lax.broadcasted_iota(jnp.int32, (1, Wp), 1)
    m_im1 = (li >= 1).astype(jnp.float32)              # tap reads T[i-1, j]
    m_ip1 = (li <= H - 2).astype(jnp.float32)          # tap reads T[i+1, j]
    m_jm1 = (col >= 1).astype(jnp.float32)             # tap reads T[i, j-1]
    m_jp1 = (col <= W_valid - 2).astype(jnp.float32)   # tap reads T[i, j+1]

    sh_up = 1          # roll giving X[i-1] (axis 0) / X[:, j-1] (axis 1)
    sh_dn_r = R - 1    # roll giving X[i+1]
    sh_dn_c = Wp - 1   # roll giving X[:, j+1]

    def layer_uniform(T, ws):
        # All 9 taps share one weight -> separable 3x3 box sum.
        rs = (T
              + m_im1 * pltpu.roll(T, shift=sh_up, axis=0)
              + m_ip1 * pltpu.roll(T, shift=sh_dn_r, axis=0))
        box = (rs
               + m_jm1 * pltpu.roll(rs, shift=sh_up, axis=1)
               + m_jp1 * pltpu.roll(rs, shift=sh_dn_c, axis=1))
        return jnp.minimum(T, box * ws)

    def layer_general(T, wl):
        # Taps grouped by column shift: 2 lane rolls + 2 column mask-muls
        # per layer (vs 6 + 6 for the tap-by-tap formulation).
        T_m1 = m_im1 * pltpu.roll(T, shift=sh_up, axis=0)     # T[i-1, j]
        T_p1 = m_ip1 * pltpu.roll(T, shift=sh_dn_r, axis=0)   # T[i+1, j]
        left = wl[0] * T_m1 + wl[3] * T + wl[6] * T_p1        # kj = 0 taps
        center = wl[1] * T_m1 + wl[4] * T + wl[7] * T_p1      # kj = 1 taps
        right = wl[2] * T_m1 + wl[5] * T + wl[8] * T_p1       # kj = 2 taps
        conv = (center
                + m_jm1 * pltpu.roll(left, shift=sh_up, axis=1)
                + m_jp1 * pltpu.roll(right, shift=sh_dn_c, axis=1))
        return jnp.minimum(T, conv * slowness)

    if num_layers <= _MAX_UNROLL_LAYERS:
        if uniform_all:
            ws = w_ref[0] * slowness       # same weight every layer -> hoisted
            for _ in range(num_layers):
                T = layer_uniform(T, ws)
        elif uniform:
            for l in range(num_layers):
                T = layer_uniform(T, w_ref[l * 9] * slowness)
        else:
            for l in range(num_layers):
                T = layer_general(T, [w_ref[l * 9 + k] for k in range(9)])
    else:
        # Many layers: fori_loop keeps code size and vreg live ranges flat;
        # weights are read from SMEM with dynamic indices.
        if uniform_all:
            ws = w_ref[0] * slowness
            T = lax.fori_loop(0, num_layers,
                              lambda l, T: layer_uniform(T, ws), T)
        elif uniform:
            T = lax.fori_loop(
                0, num_layers,
                lambda l, T: layer_uniform(T, w_ref[l * 9] * slowness), T)
        else:
            def body(l, T):
                return layer_general(T, [w_ref[l * 9 + k] for k in range(9)])
            T = lax.fori_loop(0, num_layers, body, T)

    out_ref[...] = T


def _round_up(x, m):
    return ((x + m - 1) // m) * m


def _generation_params():
    """Generation-aware per-input block target, vmem limit and min grid steps."""
    vmem_cap = 0
    try:
        vmem_cap = int(pltpu.get_tpu_info().vmem_capacity_bytes)
    except Exception:
        try:
            kind = jax.devices()[0].device_kind.lower()
            vmem_cap = (128 << 20) if ("v5" in kind or "v6" in kind) else (64 << 20)
        except Exception:
            vmem_cap = 64 << 20
    if vmem_cap >= (96 << 20):
        # v5e / v6e: 128 MiB VMEM, single TensorCore -> big blocks, no forced split.
        return dict(block_target=4 << 20, vmem_limit=64 << 20, min_steps=1)
    # v7x (64 MiB VMEM per TC, 2 TCs) or unknown: tighter blocks, >=2 steps/core.
    return dict(block_target=1 << 20, vmem_limit=40 << 20, min_steps=4)


def _pick_block_batch(N, H_pad, W_pad, block_target, min_steps, itemsize=4):
    """Images per grid step.

    H_pad is a multiple of 8 and W_pad a multiple of 128, so any bb satisfies
    the (8,128) tiling rule; we only require bb | N, a per-input block of
    roughly `block_target` bytes, and at least `min_steps` grid steps when N
    allows (>= 2 per TensorCore on v7x).
    """
    img_bytes = H_pad * W_pad * itemsize
    bb = max(1, min(N, block_target // max(1, img_bytes)))
    if min_steps > 1:
        bb = min(bb, max(1, N // min(min_steps, N)))
    while bb > 1 and N % bb != 0:
        bb -= 1
    return bb


def eikonal_solver_multilayer(T_init, sos_pred, weights, *, uniform=None):
    """Pallas forward pass of EikonalSolverMultiLayer.

    T_init, sos_pred : f32[N, 1, H, W]   (NCHW, single channel)
    weights          : f32[num_layers, 3, 3]
    uniform          : optional static hint that every layer's 9 taps are equal
                       (the module's actual init).  If None, a host-side numpy
                       check is used when `weights` is concrete; under jit
                       tracing it defaults to the general path.
    """
    N, C, H, W = T_init.shape
    assert C == 1, "module is a 1->1 channel conv"
    num_layers = int(weights.shape[0])

    # --- static fast-path selection (host-side, no device round-trip) --------
    uniform_all = False
    if uniform is None:
        try:
            w_np = np.asarray(weights, dtype=np.float32).reshape(num_layers, 9)
            uniform = bool(np.all(w_np == w_np[:, :1]))
            uniform_all = uniform and bool(np.all(w_np == w_np[0, 0]))
        except Exception:          # tracer under jit -> general path
            uniform = False
    uniform = bool(uniform)
    uniform_all = bool(uniform_all) and uniform

    # --- padding: lane-dense W (x128) and sublane-aligned H (x8) -------------
    H_pad = _round_up(H, 8)
    W_pad = _round_up(W, 128)
    T3 = T_init.reshape(N, H, W).astype(jnp.float32)
    S3 = sos_pred.reshape(N, H, W).astype(jnp.float32)
    if H_pad != H or W_pad != W:
        pad = ((0, 0), (0, H_pad - H), (0, W_pad - W))
        T3 = jnp.pad(T3, pad)                          # T pad value 0
        S3 = jnp.pad(S3, pad, constant_values=1.0)     # keep 1/sos finite
    t2 = T3.reshape(N * H_pad, W_pad)
    s2 = S3.reshape(N * H_pad, W_pad)
    w_flat = jnp.asarray(weights, jnp.float32).reshape(num_layers * 9)

    # --- generation-aware tiling ---------------------------------------------
    gp = _generation_params()
    bb = _pick_block_batch(N, H_pad, W_pad, gp["block_target"], gp["min_steps"])
    grid = (N // bb,)
    blk = (bb * H_pad, W_pad)

    kernel = functools.partial(_eikonal_kernel, num_layers, H, H_pad, W,
                               uniform, uniform_all)

    out = pl.pallas_call(
        kernel,
        out_shape=jax.ShapeDtypeStruct((N * H_pad, W_pad), jnp.float32),
        grid_spec=pltpu.PrefetchScalarGridSpec(
            num_scalar_prefetch=1,                        # weights -> SMEM once
            grid=grid,
            in_specs=[
                pl.BlockSpec(blk, lambda b, w: (b, 0)),   # T_init slab
                pl.BlockSpec(blk, lambda b, w: (b, 0)),   # sos_pred slab
            ],
            out_specs=pl.BlockSpec(blk, lambda b, w: (b, 0)),
        ),
        compiler_params=pltpu.CompilerParams(
            dimension_semantics=("parallel",),
            vmem_limit_bytes=gp["vmem_limit"]),
    )(w_flat, t2, s2)

    out = out.reshape(N, H_pad, W_pad)[:, :H, :W]
    return out.reshape(N, 1, H, W)


def _reference(T_init, sos_pred, weights):
    """Pure-JAX reference matching the PyTorch module."""
    N, C, H, W = T_init.shape
    T = T_init.reshape(N, H, W)
    slowness = 1.0 / sos_pred.reshape(N, H, W)
    for l in range(weights.shape[0]):
        Tp = jnp.pad(T, ((0, 0), (1, 1), (1, 1)))
        conv = jnp.zeros_like(T)
        for ki in range(3):
            for kj in range(3):
                conv = conv + weights[l, ki, kj] * Tp[:, ki:ki + H, kj:kj + W]
        T = jnp.minimum(T, conv * slowness)
    return T.reshape(N, 1, H, W)


if __name__ == "__main__":
    # Module hyperparameters (deterministic init as in __init__).
    num_layers = 3
    speed_of_sound = 1500.0
    domain_size = 0.1
    grid_resolution = 128
    kernel_size = 3
    delta_s = domain_size / grid_resolution
    weights = jnp.full((num_layers, kernel_size, kernel_size),
                       delta_s / speed_of_sound, dtype=jnp.float32)

    key = jax.random.PRNGKey(0)
    k1, k2, k3, k4, k5, k6 = jax.random.split(key, 6)

    # Small deterministic inputs: N=2, C=1, H=16, W=128.
    N, H, W = 2, 16, 128
    T_init = jax.random.uniform(k1, (N, 1, H, W), jnp.float32,
                                minval=0.0, maxval=10.0)
    sos_pred = jax.random.uniform(k2, (N, 1, H, W), jnp.float32,
                                  minval=1400.0, maxval=1600.0)

    # 1) Module's actual init (uniform taps, all layers equal) -> box-sum path
    #    with ws = w * slowness hoisted out of the layer loop.
    out = jax.block_until_ready(
        eikonal_solver_multilayer(T_init, sos_pred, weights))
    ref = _reference(T_init, sos_pred, weights)
    assert out.shape == (N, 1, H, W)
    assert jnp.allclose(out, ref, rtol=1e-5, atol=1e-6), \
        "mismatch vs reference (uniform weights)"

    # 2) General (non-uniform) weights exercise the column-grouped stencil path.
    w_rand = jax.random.uniform(k3, (num_layers, kernel_size, kernel_size),
                                jnp.float32, minval=1e-7, maxval=1e-6)
    out2 = jax.block_until_ready(
        eikonal_solver_multilayer(T_init, sos_pred, w_rand))
    ref2 = _reference(T_init, sos_pred, w_rand)
    assert jnp.allclose(out2, ref2, rtol=1e-5, atol=1e-6), \
        "mismatch vs reference (general weights)"

    # 3) Many layers (> unroll threshold) exercise the fori_loop path with
    #    dynamic SMEM weight reads.
    w_many = jax.random.uniform(k4, (12, kernel_size, kernel_size),
                                jnp.float32, minval=1e-7, maxval=1e-6)
    out3 = jax.block_until_ready(
        eikonal_solver_multilayer(T_init, sos_pred, w_many))
    ref3 = _reference(T_init, sos_pred, w_many)
    assert jnp.allclose(out3, ref3, rtol=1e-5, atol=1e-6), \
        "mismatch vs reference (12 layers, fori path)"

    # 4) Odd spatial sizes (H not multiple of 8, W not multiple of 128)
    #    exercise the padding / lane-dense path.
    N2, H2, W2 = 3, 10, 96
    T_init2 = jax.random.uniform(k5, (N2, 1, H2, W2), jnp.float32,
                                 minval=0.0, maxval=10.0)
    sos_pred2 = jax.random.uniform(k6, (N2, 1, H2, W2), jnp.float32,
                                   minval=1400.0, maxval=1600.0)
    out4 = jax.block_until_ready(
        eikonal_solver_multilayer(T_init2, sos_pred2, weights))
    ref4 = _reference(T_init2, sos_pred2, weights)
    assert out4.shape == (N2, 1, H2, W2)
    assert jnp.allclose(out4, ref4, rtol=1e-5, atol=1e-6), \
        "mismatch vs reference (padded H/W case)"

    print("KERNEL_OK")
</pallas_src>

<mosaic_0001>
module attributes {stable_mosaic.version = 11 : i64} {
  func.func @_eikonal_kernel(%arg0: i32, %arg1: memref<27xf32, #tpu.memory_space<smem>>, %arg2: memref<16x128xf32, #tpu.memory_space<vmem>>, %arg3: memref<16x128xf32, #tpu.memory_space<vmem>>, %arg4: memref<16x128xf32, #tpu.memory_space<vmem>>) attributes {dimension_semantics = [#tpu.dimension_semantics<parallel>], iteration_bounds = array<i64: 2>, scalar_prefetch = 1 : i64, scratch_operands = 0 : i64, tpu.core_type = #tpu.core_type<tc>, window_params = [{transform_indices = @transform_0, window_bounds = array<i64: 16, 128>}, {transform_indices = @transform_1, window_bounds = array<i64: 16, 128>}, {transform_indices = @transform_2, window_bounds = array<i64: 16, 128>}]} {
    %c0 = arith.constant 0 : index
    %c0_0 = arith.constant 0 : index
    %0 = vector.load %arg2[%c0, %c0_0] : memref<16x128xf32, #tpu.memory_space<vmem>>, vector<16x128xf32>
    %c0_1 = arith.constant 0 : index
    %c0_2 = arith.constant 0 : index
    %1 = vector.load %arg3[%c0_1, %c0_2] : memref<16x128xf32, #tpu.memory_space<vmem>>, vector<16x128xf32>
    %cst = arith.constant 1.000000e+00 : f32
    %2 = vector.broadcast %cst : f32 to vector<16x128xf32>
    %3 = arith.divf %2, %1 : vector<16x128xf32>
    %4 = tpu.iota {dimensions = array<i32: 0>} : vector<16x1xi32>
    %c16_i32 = arith.constant 16 : i32
    %c0_i32 = arith.constant 0 : i32
    %5 = arith.cmpi eq, %c16_i32, %c0_i32 : i32
    %c1_i32 = arith.constant 1 : i32
    %6 = arith.select %5, %c1_i32, %c16_i32 : i32
    %7 = vector.broadcast %6 : i32 to vector<16x1xi32>
    %8 = arith.remsi %4, %7 : vector<16x1xi32>
    %c0_i32_3 = arith.constant 0 : i32
    %9 = vector.broadcast %c0_i32_3 : i32 to vector<16x1xi32>
    %10 = arith.cmpi ne, %8, %9 : vector<16x1xi32>
    %c0_i32_4 = arith.constant 0 : i32
    %11 = vector.broadcast %c0_i32_4 : i32 to vector<16x1xi32>
    %12 = arith.cmpi slt, %8, %11 : vector<16x1xi32>
    %c0_i32_5 = arith.constant 0 : i32
    %13 = arith.cmpi slt, %6, %c0_i32_5 : i32
    %14 = vector.broadcast %13 : i1 to vector<16x1xi1>
    %15 = vector.broadcast %14 : vector<16x1xi1> to vector<16x1xi1>
    %16 = arith.xori %12, %15 : vector<16x1xi1>
    %17 = arith.andi %16, %10 : vector<16x1xi1>
    %18 = vector.broadcast %6 : i32 to vector<16x1xi32>
    %19 = arith.addi %8, %18 : vector<16x1xi32>
    %20 = arith.select %17, %19, %8 : vector<16x1xi1>, vector<16x1xi32>
    %21 = tpu.iota {dimensions = array<i32: 1>} : vector<1x128xi32>
    %c1_i32_6 = arith.constant 1 : i32
    %22 = vector.broadcast %c1_i32_6 : i32 to vector<16x1xi32>
    %23 = arith.cmpi sge, %20, %22 : vector<16x1xi32>
    %24 = arith.extui %23 : vector<16x1xi1> to vector<16x1xi32>
    %25 = arith.sitofp %24 : vector<16x1xi32> to vector<16x1xf32>
    %c14_i32 = arith.constant 14 : i32
    %26 = vector.broadcast %c14_i32 : i32 to vector<16x1xi32>
    %27 = arith.cmpi sle, %20, %26 : vector<16x1xi32>
    %28 = arith.extui %27 : vector<16x1xi1> to vector<16x1xi32>
    %29 = arith.sitofp %28 : vector<16x1xi32> to vector<16x1xf32>
    %c1_i32_7 = arith.constant 1 : i32
    %30 = vector.broadcast %c1_i32_7 : i32 to vector<1x128xi32>
    %31 = arith.cmpi sge, %21, %30 : vector<1x128xi32>
    %32 = arith.extui %31 : vector<1x128xi1> to vector<1x128xi32>
    %33 = arith.sitofp %32 : vector<1x128xi32> to vector<1x128xf32>
    %c126_i32 = arith.constant 126 : i32
    %34 = vector.broadcast %c126_i32 : i32 to vector<1x128xi32>
    %35 = arith.cmpi sle, %21, %34 : vector<1x128xi32>
    %36 = arith.extui %35 : vector<1x128xi1> to vector<1x128xi32>
    %37 = arith.sitofp %36 : vector<1x128xi32> to vector<1x128xf32>
    %c0_8 = arith.constant 0 : index
    %38 = memref.load %arg1[%c0_8] : memref<27xf32, #tpu.memory_space<smem>>
    %39 = vector.broadcast %38 : f32 to vector<16x128xf32>
    %40 = arith.mulf %39, %3 : vector<16x128xf32>
    %c1_i32_9 = arith.constant 1 : i32
    %41 = tpu.dynamic_rotate %0 by %c1_i32_9 dim 0 : vector<16x128xf32>, i32 -> vector<16x128xf32>
    %42 = vector.broadcast %25 : vector<16x1xf32> to vector<16x128xf32>
    %43 = arith.mulf %42, %41 : vector<16x128xf32>
    %44 = arith.addf %0, %43 : vector<16x128xf32>
    %c15_i32 = arith.constant 15 : i32
    %45 = tpu.dynamic_rotate %0 by %c15_i32 dim 0 : vector<16x128xf32>, i32 -> vector<16x128xf32>
    %46 = vector.broadcast %29 : vector<16x1xf32> to vector<16x128xf32>
    %47 = arith.mulf %46, %45 : vector<16x128xf32>
    %48 = arith.addf %44, %47 : vector<16x128xf32>
    %c1_i32_10 = arith.constant 1 : i32
    %49 = tpu.dynamic_rotate %48 by %c1_i32_10 dim 1 : vector<16x128xf32>, i32 -> vector<16x128xf32>
    %50 = vector.broadcast %33 : vector<1x128xf32> to vector<16x128xf32>
    %51 = arith.mulf %50, %49 : vector<16x128xf32>
    %52 = arith.addf %48, %51 : vector<16x128xf32>
    %c127_i32 = arith.constant 127 : i32
    %53 = tpu.dynamic_rotate %48 by %c127_i32 dim 1 : vector<16x128xf32>, i32 -> vector<16x128xf32>
    %54 = vector.broadcast %37 : vector<1x128xf32> to vector<16x128xf32>
    %55 = arith.mulf %54, %53 : vector<16x128xf32>
    %56 = arith.addf %52, %55 : vector<16x128xf32>
    %57 = arith.mulf %56, %40 : vector<16x128xf32>
    %58 = arith.minimumf %0, %57 : vector<16x128xf32>
    %c1_i32_11 = arith.constant 1 : i32
    %59 = tpu.dynamic_rotate %58 by %c1_i32_11 dim 0 : vector<16x128xf32>, i32 -> vector<16x128xf32>
    %60 = vector.broadcast %25 : vector<16x1xf32> to vector<16x128xf32>
    %61 = arith.mulf %60, %59 : vector<16x128xf32>
    %62 = arith.addf %58, %61 : vector<16x128xf32>
    %c15_i32_12 = arith.constant 15 : i32
    %63 = tpu.dynamic_rotate %58 by %c15_i32_12 dim 0 : vector<16x128xf32>, i32 -> vector<16x128xf32>
    %64 = vector.broadcast %29 : vector<16x1xf32> to vector<16x128xf32>
    %65 = arith.mulf %64, %63 : vector<16x128xf32>
    %66 = arith.addf %62, %65 : vector<16x128xf32>
    %c1_i32_13 = arith.constant 1 : i32
    %67 = tpu.dynamic_rotate %66 by %c1_i32_13 dim 1 : vector<16x128xf32>, i32 -> vector<16x128xf32>
    %68 = vector.broadcast %33 : vector<1x128xf32> to vector<16x128xf32>
    %69 = arith.mulf %68, %67 : vector<16x128xf32>
    %70 = arith.addf %66, %69 : vector<16x128xf32>
    %c127_i32_14 = arith.constant 127 : i32
    %71 = tpu.dynamic_rotate %66 by %c127_i32_14 dim 1 : vector<16x128xf32>, i32 -> vector<16x128xf32>
    %72 = vector.broadcast %37 : vector<1x128xf32> to vector<16x128xf32>
    %73 = arith.mulf %72, %71 : vector<16x128xf32>
    %74 = arith.addf %70, %73 : vector<16x128xf32>
    %75 = arith.mulf %74, %40 : vector<16x128xf32>
    %76 = arith.minimumf %58, %75 : vector<16x128xf32>
    %c1_i32_15 = arith.constant 1 : i32
    %77 = tpu.dynamic_rotate %76 by %c1_i32_15 dim 0 : vector<16x128xf32>, i32 -> vector<16x128xf32>
    %78 = vector.broadcast %25 : vector<16x1xf32> to vector<16x128xf32>
    %79 = arith.mulf %78, %77 : vector<16x128xf32>
    %80 = arith.addf %76, %79 : vector<16x128xf32>
    %c15_i32_16 = arith.constant 15 : i32
    %81 = tpu.dynamic_rotate %76 by %c15_i32_16 dim 0 : vector<16x128xf32>, i32 -> vector<16x128xf32>
    %82 = vector.broadcast %29 : vector<16x1xf32> to vector<16x128xf32>
    %83 = arith.mulf %82, %81 : vector<16x128xf32>
    %84 = arith.addf %80, %83 : vector<16x128xf32>
    %c1_i32_17 = arith.constant 1 : i32
    %85 = tpu.dynamic_rotate %84 by %c1_i32_17 dim 1 : vector<16x128xf32>, i32 -> vector<16x128xf32>
    %86 = vector.broadcast %33 : vector<1x128xf32> to vector<16x128xf32>
    %87 = arith.mulf %86, %85 : vector<16x128xf32>
    %88 = arith.addf %84, %87 : vector<16x128xf32>
    %c127_i32_18 = arith.constant 127 : i32
    %89 = tpu.dynamic_rotate %84 by %c127_i32_18 dim 1 : vector<16x128xf32>, i32 -> vector<16x128xf32>
    %90 = vector.broadcast %37 : vector<1x128xf32> to vector<16x128xf32>
    %91 = arith.mulf %90, %89 : vector<16x128xf32>
    %92 = arith.addf %88, %91 : vector<16x128xf32>
    %93 = arith.mulf %92, %40 : vector<16x128xf32>
    %94 = arith.minimumf %76, %93 : vector<16x128xf32>
    %c0_19 = arith.constant 0 : index
    %c0_20 = arith.constant 0 : index
    %95 = vector.load %arg4[%c0_19, %c0_20] : memref<16x128xf32, #tpu.memory_space<vmem>>, vector<16x128xf32>
    tpu.vector_store %arg4[%c0_19, %c0_20], %94 {strides = array<i32>} : memref<16x128xf32, #tpu.memory_space<vmem>>, vector<16x128xf32>,
    return
  }
  func.func @transform_0(%arg0: i32, %arg1: memref<27xf32, #tpu.memory_space<smem>>) -> (i32, i32) {
    %c0_i32 = arith.constant 0 : i32
    %c0_i32_0 = arith.constant 0 : i32
    return %arg0, %c0_i32 : i32, i32
  }
  func.func @transform_1(%arg0: i32, %arg1: memref<27xf32, #tpu.memory_space<smem>>) -> (i32, i32) {
    %c0_i32 = arith.constant 0 : i32
    %c0_i32_0 = arith.constant 0 : i32
    return %arg0, %c0_i32 : i32, i32
  }
  func.func @transform_2(%arg0: i32, %arg1: memref<27xf32, #tpu.memory_space<smem>>) -> (i32, i32) {
    %c0_i32 = arith.constant 0 : i32
    %c0_i32_0 = arith.constant 0 : i32
    return %arg0, %c0_i32 : i32, i32
  }
}

</mosaic_0001>

<llo_original>
// kernel: tpu_custom_call.1
$region0: #{tpu_custom_call.1}
  #allocation0 [shape = 'u32[]', space=smem, size = 0x4, offset = 0x4, fixed_abs, tag = 'smem constant byte address 0x4 - core index']
  #allocation1 [shape = 'u32[72,128]{1,0:T(1,128)}', space=vmem, size = 0x9000, scoped, tag = 'internal scratch']
  #allocation2 [shape = 's32[1]{0}', space=sflag, size = 0x4, scoped, tag = 'scoped memory for tpu_custom_call.1']
  #allocation3 [shape = 'u8[512]{0}', space=smem, size = 0x200, scoped, tag = 'prefetched SMEM operand 0']
  %s0 = inlined_call_operand.hbm [shape: f32[27], index: 0, kind: input, shape index: {}]
  %s1 = inlined_call_operand.hbm [shape: f32[32,128], index: 1, kind: input, shape index: {}]
  %s2 = inlined_call_operand.hbm [shape: f32[32,128], index: 2, kind: input, shape index: {}]
  %s3 = inlined_call_operand.hbm [shape: f32[32,128], index: 3, kind: output, shape index: {}]
  %s4 = sld [smem:[#allocation0]]
  $region49: #{tpu_custom_call.1} parent=0
    _
  %s6 = ssub.s32 1, %s4
  %s7 = scalar_select 0, %s6, %s4
  %s9 = sshll.u32 %s0, 4
  %s10 = int_to_ptr.hbm [resolvable:$true] %s9
  %12 = dma.hbm_to_smem %s10, 16, [#allocation3], [#allocation2]
  %14 = dma.done [#allocation2], 16
  %15 = sfence
  $region1: #{tpu_custom_call.1} parent=0
    #allocation4 [shape = 'u8[16384]{0}', space=vmem, size = 0x4000, scoped, tag = 'input window, operand 1']
    #allocation5 [shape = 's32[2]{0}', space=sflag, size = 0x8, scoped, tag = 'scoped memory for tpu_custom_call.1']
    #allocation6 [shape = 's32[2]{0}', space=sflag, size = 0x8, scoped, tag = 'scoped memory for tpu_custom_call.1']
    #allocation7 [shape = 'u8[16384]{0}', space=vmem, size = 0x4000, scoped, tag = 'input window, operand 2']
    #allocation8 [shape = 's32[2]{0}', space=sflag, size = 0x8, scoped, tag = 'scoped memory for tpu_custom_call.1']
    #allocation9 [shape = 'u8[16384]{0}', space=vmem, size = 0x4000, scoped, tag = 'output window, operand 0']
    %16 = vsyncpa [#allocation5], 0
    %s17 = scalar_lea.sflag [#allocation5], 1
    %18 = vsyncpa %s17, 0
    %19 = vsyncpa [#allocation8], 0
    %s20 = scalar_lea.sflag [#allocation8], 1
    %21 = vsyncpa %s20, 0
    %22 = vsyncpa [#allocation6], 0
    %s23 = scalar_lea.sflag [#allocation6], 1
    %24 = vsyncpa %s23, 0
    loop: start=0, step=1, limit=4
    $region2: #{tpu_custom_call.1} parent=1 // loop_pre_header
      _
    $region3: #{tpu_custom_call.1} parent=1 // loop_header
      %s26 = sphi 0, %s30
      %p27 = scmp.ge.s32.totalorder %s26, 4
      %s36 = sphi 0, %s38
      %s39 = sphi 0, %s36
      %s40 = sphi 0, %s39
      %s56 = sphi 0, %s40
      %s62 = sphi 0, %s64
      %s65 = sphi 0, %s62
      %s66 = sphi 0, %s65
      %s82 = sphi 0, %s66
      %s88 = sphi 0, %s90
      %s91 = sphi 0, %s88
      %s92 = sphi 0, %s91
      %s108 = sphi 0, %s92
    $region4: #{tpu_custom_call.1} parent=1 // loop_header_branch
      %29 = sbr.rel (%p27) target = $region8
    $region5: #{tpu_custom_call.1} parent=1 // loop_body
      %s31 = ssub.s32 %s26, 1
      %s32 = ssub.s32 %s26, 2
      %s33 = sadd.s32 %s26, 1
      %s34 = ssub.s32 %s26, %s33
      %p35 = scmp.eq.s32.totalorder %s34, 0
      %s37 = sadd.s32 %s36, 1
      %s38 = scalar_select %p35, %s36, %s37
      %p41 = pneg %p35
      %p42 = scmp.eq.s32.totalorder %s26, 1
      %p43 = por %p41, %p42
      %p44 = scmp.ne.s32.totalorder %s36, %s39
      %p45 = scmp.eq.s32.totalorder %s26, 0
      %p46 = por %p44, %p45
      %p47 = scmp.ne.s32.totalorder %s36, %s39
      %p48 = scmp.eq.s32.totalorder %s31, 1
      %p49 = por %p47, %p48
      %p50 = scmp.ne.s32.totalorder %s39, %s40
      %p51 = scmp.eq.s32.totalorder %s31, 0
      %p52 = por %p50, %p51
      %p53 = scmp.ne.s32.totalorder %s39, %s40
      %p54 = scmp.eq.s32.totalorder %s32, 1
      %p55 = por %p53, %p54
      %p57 = scmp.ne.s32.totalorder %s40, %s56
      %p58 = scmp.eq.s32.totalorder %s32, 0
      %p59 = por %p57, %p58
      %s60 = ssub.s32 %s26, %s33
      %p61 = scmp.eq.s32.totalorder %s60, 0
      %s63 = sadd.s32 %s62, 1
      %s64 = scalar_select %p61, %s62, %s63
      %p67 = pneg %p61
      %p68 = scmp.eq.s32.totalorder %s26, 1
      %p69 = por %p67, %p68
      %p70 = scmp.ne.s32.totalorder %s62, %s65
      %p71 = scmp.eq.s32.totalorder %s26, 0
      %p72 = por %p70, %p71
      %p73 = scmp.ne.s32.totalorder %s62, %s65
      %p74 = scmp.eq.s32.totalorder %s31, 1
      %p75 = por %p73, %p74
      %p76 = scmp.ne.s32.totalorder %s65, %s66
      %p77 = scmp.eq.s32.totalorder %s31, 0
      %p78 = por %p76, %p77
      %p79 = scmp.ne.s32.totalorder %s65, %s66
      %p80 = scmp.eq.s32.totalorder %s32, 1
      %p81 = por %p79, %p80
      %p83 = scmp.ne.s32.totalorder %s66, %s82
      %p84 = scmp.eq.s32.totalorder %s32, 0
      %p85 = por %p83, %p84
      %s86 = ssub.s32 %s26, %s33
      %p87 = scmp.eq.s32.totalorder %s86, 0
      %s89 = sadd.s32 %s88, 1
      %s90 = scalar_select %p87, %s88, %s89
      %p93 = pneg %p87
      %p94 = scmp.eq.s32.totalorder %s26, 1
      %p95 = por %p93, %p94
      %p96 = scmp.ne.s32.totalorder %s88, %s91
      %p97 = scmp.eq.s32.totalorder %s26, 0
      %p98 = por %p96, %p97
      %p99 = scmp.ne.s32.totalorder %s88, %s91
      %p100 = scmp.eq.s32.totalorder %s31, 1
      %p101 = por %p99, %p100
      %p102 = scmp.ne.s32.totalorder %s91, %s92
      %p103 = scmp.eq.s32.totalorder %s31, 0
      %p104 = por %p102, %p103
      %p105 = scmp.ne.s32.totalorder %s91, %s92
      %p106 = scmp.eq.s32.totalorder %s32, 1
      %p107 = por %p105, %p106
      %p109 = scmp.ne.s32.totalorder %s92, %s108
      %p110 = scmp.eq.s32.totalorder %s32, 0
      %p111 = por %p109, %p110
      %p112 = scmp.le.s32.totalorder 1, %s26
      %p113 = scmp.lt.s32.totalorder %s26, 3
      %p114 = pnand %p112, %p113
      %p115 = pneg %p114
      // Predicated region
      $region9: #{tpu_custom_call.1} parent=5 // pred_check
        _
      $region10: #{tpu_custom_call.1} parent=5 // pred_check_branch
        %117 = sbr.rel (%p114) target = $region12
      $region11: #{tpu_custom_call.1} parent=5 // pred_region
        %s118 = ssub.s32 %s26, 1
      $region12: #{tpu_custom_call.1} parent=5 // pred_fallthru
        _
      %p119 = scmp.lt.s32.totalorder %s26, 2
      // Predicated region
      $region13: #{tpu_custom_call.1} parent=5 // pred_check
        %p120 = pneg %p119
      $region14: #{tpu_custom_call.1} parent=5 // pred_check_branch
        %122 = sbr.rel (%p120) target = $region16
      $region15: #{tpu_custom_call.1} parent=5 // pred_region
        // Predicated region
        $region17: #{tpu_custom_call.1} parent=15 // pred_check
          %p123 = pneg %p46
        $region18: #{tpu_custom_call.1} parent=15 // pred_check_branch
          %125 = sbr.rel (%p123) target = $region20
        $region19: #{tpu_custom_call.1} parent=15 // pred_region
          %s126 = sand.u32 %s36, 1
          %s127 = scalar_lea.sflag [#allocation5], %s126
          %s128 = sand.u32 %s36, 1
          %s129 = smul.addr %s128, 16
          %s130 = scalar_lea.vmem [#allocation4], %s129
          %s131 = smul.u32 2, %s26
          %133 = vsyncadd %s127, 0
          %s134 = smul.addr %s131, 8
          %s135 = scalar_lea.hbm %s1, %s134
          %s136 = sshll.u32 %s135, 4
          %s137 = int_to_ptr.hbm [resolvable:$true] %s136
          %s138 = sshll.u32 %s130, 4
          %s139 = int_to_ptr.vmem [resolvable:$true] %s138
          %144 = dma.hbm_to_vmem [thread:$0]  %s137, 256, %s139, %s127, 128, 128, 8
        $region20: #{tpu_custom_call.1} parent=15 // pred_fallthru
          _
        // Predicated region
        $region21: #{tpu_custom_call.1} parent=15 // pred_check
          %p145 = pneg %p72
        $region22: #{tpu_custom_call.1} parent=15 // pred_check_branch
          %147 = sbr.rel (%p145) target = $region24
        $region23: #{tpu_custom_call.1} parent=15 // pred_region
          %s148 = sand.u32 %s62, 1
          %s149 = scalar_lea.sflag [#allocation8], %s148
          %s150 = sand.u32 %s62, 1
          %s151 = smul.addr %s150, 16
          %s152 = scalar_lea.vmem [#allocation7], %s151
          %s153 = smul.u32 2, %s26
          %155 = vsyncadd %s149, 0
          %s156 = smul.addr %s153, 8
          %s157 = scalar_lea.hbm %s2, %s156
          %s158 = sshll.u32 %s157, 4
          %s159 = int_to_ptr.hbm [resolvable:$true] %s158
          %s160 = sshll.u32 %s152, 4
          %s161 = int_to_ptr.vmem [resolvable:$true] %s160
          %166 = dma.hbm_to_vmem [thread:$0]  %s159, 256, %s161, %s149, 128, 128, 8
        $region24: #{tpu_custom_call.1} parent=15 // pred_fallthru
          _
      $region16: #{tpu_custom_call.1} parent=5 // pred_fallthru
        _
      %p167 = scmp.le.s32.totalorder 1, %s26
      %p168 = scmp.lt.s32.totalorder %s26, 3
      %p169 = pnand %p167, %p168
      %p170 = pneg %p169
      // Predicated region
      $region25: #{tpu_custom_call.1} parent=5 // pred_check
        _
      $region26: #{tpu_custom_call.1} parent=5 // pred_check_branch
        %172 = sbr.rel (%p169) target = $region28
      $region27: #{tpu_custom_call.1} parent=5 // pred_region
        %s173 = ssub.s32 %s26, 1
        %s174 = sand.u32 %s39, 1
        %s175 = scalar_lea.sflag [#allocation5], %s174
        %s176 = sand.u32 %s39, 1
        %s177 = smul.addr %s176, 16
        %s178 = scalar_lea.vmem [#allocation4], %s177
        // Predicated region
        $region29: #{tpu_custom_call.1} parent=27 // pred_check
          %p179 = pneg %p52
        $region30: #{tpu_custom_call.1} parent=27 // pred_check_branch
          %181 = sbr.rel (%p179) target = $region32
        $region31: #{tpu_custom_call.1} parent=27 // pred_region
          %183 = dma.done %s175, 256
        $region32: #{tpu_custom_call.1} parent=27 // pred_fallthru
          _
        %s184 = sand.u32 %s65, 1
        %s185 = scalar_lea.sflag [#allocation8], %s184
        %s186 = sand.u32 %s65, 1
        %s187 = smul.addr %s186, 16
        %s188 = scalar_lea.vmem [#allocation7], %s187
        // Predicated region
        $region33: #{tpu_custom_call.1} parent=27 // pred_check
          %p189 = pneg %p78
        $region34: #{tpu_custom_call.1} parent=27 // pred_check_branch
          %191 = sbr.rel (%p189) target = $region36
        $region35: #{tpu_custom_call.1} parent=27 // pred_region
          %193 = dma.done %s185, 256
        $region36: #{tpu_custom_call.1} parent=27 // pred_fallthru
          _
        %s194 = sand.u32 %s39, 1
        %s195 = scalar_lea.sflag [#allocation5], %s194
        %s196 = sand.u32 %s39, 1
        %s197 = smul.addr %s196, 16
        %s198 = scalar_lea.vmem [#allocation4], %s197
        %p199 = pneg %p52
        %p200 = pneg %p49
        %s201 = sand.u32 %s65, 1
        %s202 = scalar_lea.sflag [#allocation8], %s201
        %s203 = sand.u32 %s65, 1
        %s204 = smul.addr %s203, 16
        %s205 = scalar_lea.vmem [#allocation7], %s204
        %p206 = pneg %p78
        %p207 = pneg %p75
        %p208 = pneg %p104
        %p209 = pneg %p101
        %s210 = sand.u32 %s91, 1
        %s211 = scalar_lea.sflag [#allocation6], %s210
        %s212 = sand.u32 %s91, 1
        %s213 = smul.addr %s212, 16
        %s214 = scalar_lea.vmem [#allocation9], %s213
        %s215 = smul.u32 2, %s31
        %s216 = smul.u32 2, %s31
        %s217 = smul.u32 2, %s31
        %v218 = vld [vmem:[%s178] sm:$0xff]
        %v219 = vld [vmem:[%s178 + $0x8] sm:$0xff]
        %v220 = vld [vmem:[%s188] sm:$0xff]
        %v221 = vld [vmem:[%s188 + $0x8] sm:$0xff]
        %v222 = vrcp.pop %v220
        %v223 = vmul.f32 %v220, %v222
        %v224 = vsub.f32 1.0, %v223
        %v225 = vmul.f32 %v222, %v224
        %v226 = vadd.f32 %v222, %v225
        %vm227 = vweird.f32 %v220
        %vm228 = vweird.f32 %v222
        %vm229 = vmor %vm227, %vm228
        %v230 = vsel %vm229, %v222, %v226
        %v231 = vand.u32 2147483647, %v220
        %vm232 = vcmp.eq.f32.partialorder %v231, 8.507059e+37
        %v233 = vand.u32 %v220, 2147483648
        %v234 = vor.u32 1.1754944e-38, %v233
        %v235 = vsel %vm232, %v234, %v230
        %v236 = vmul.f32 1.0, %v235
        %v237 = vrcp.pop %v221
        %v238 = vmul.f32 %v221, %v237
        %v239 = vsub.f32 1.0, %v238
        %v240 = vmul.f32 %v237, %v239
        %v241 = vadd.f32 %v237, %v240
        %vm242 = vweird.f32 %v221
        %vm243 = vweird.f32 %v237
        %vm244 = vmor %vm242, %vm243
        %v245 = vsel %vm244, %v237, %v241
        %v246 = vand.u32 2147483647, %v221
        %vm247 = vcmp.eq.f32.partialorder %v246, 8.507059e+37
        %v248 = vand.u32 %v221, 2147483648
        %v249 = vor.u32 1.1754944e-38, %v248
        %v250 = vsel %vm247, %v249, %v245
        %v251 = vmul.f32 1.0, %v250
        %v252 = vlaneseq
        %v253 = vshrl.u32 %v252, 7
        %v254 = vadd.s32 %v253, 8
        %vm255 = vcmp.lt.s32.totalorder %v253, 0
        %v256 = vsub.s32 0, %v253
        %v257 = vsel %vm255, %v256, %v253
        %v258 = vshrl.u32 %v257, 4
        %v259 = vand.u32 %v257, 15
        %v260 = vsub.s32 0, %v259
        %v261 = vsel %vm255, %v260, %v259
        %vm262 = vcmp.lt.s32.totalorder %v254, 0
        %v263 = vsub.s32 0, %v254
        %v264 = vsel %vm262, %v263, %v254
        %v265 = vshrl.u32 %v264, 4
        %v266 = vand.u32 %v264, 15
        %v267 = vsub.s32 0, %v266
        %v268 = vsel %vm262, %v267, %v266
        %vm269 = vcmp.ne.s32.totalorder %v261, 0
        %vm270 = vcmp.ne.s32.totalorder %v268, 0
        %vm271 = vcmp.lt.s32.totalorder %v261, 0
        %vm272 = vcmp.lt.s32.totalorder %v268, 0
        %vm273 = vmand %vm271, %vm269
        %vm274 = vmand %vm272, %vm270
        %v275 = vadd.s32 %v261, 16
        %v276 = vadd.s32 %v268, 16
        %v277 = vsel %vm273, %v275, %v261
        %v278 = vsel %vm274, %v276, %v268
        %v279 = vlaneseq
        %v280 = vand.u32 %v279, 127
        %vm281 = vcmp.ge.s32.totalorder %v277, 1
        %vm282 = vcmp.ge.s32.totalorder %v278, 1
        %v283 = vsel %vm281, 1, 0
        %v284 = vsel %vm282, 1, 0
        %v285 = vcvt.s32.f32 %v283
        %v286 = vcvt.s32.f32 %v284
        %vm287 = vcmp.le.s32.totalorder %v277, 14
        %vm288 = vcmp.le.s32.totalorder %v278, 14
        %v289 = vsel %vm287, 1, 0
        %v290 = vsel %vm288, 1, 0
        %v291 = vcvt.s32.f32 %v289
        %v292 = vcvt.s32.f32 %v290
        %vm293 = vcmp.ge.s32.totalorder %v280, 1
        %v294 = vsel %vm293, 1, 0
        %v295 = vcvt.s32.f32 %v294
        %vm296 = vcmp.le.s32.totalorder %v280, 126
        %v297 = vsel %vm296, 1, 0
        %v298 = vcvt.s32.f32 %v297
        %s299 = sld [smem:[#allocation3]]
        %v300 = vstv %s299
        %v301 = vmul.f32 %v300, %v236
        %v302 = vmul.f32 %v300, %v251
        %v303 = vrot.slane %v218, 7
        %v304 = vrot.slane %v219, 7
        %vm305 = vcmp.lt.s32.totalorder %v253, 1
        %v306 = vsel %vm305, %v303, %v304
        %v307 = vsel %vm305, %v304, %v303
        %v308 = vmul.f32 %v285, %v307
        %v309 = vmul.f32 %v286, %v306
        %v310 = vadd.f32 %v218, %v308
        %v311 = vadd.f32 %v219, %v309
        %v312 = vrot.slane %v218, 1
        %v313 = vrot.slane %v219, 1
        %vm314 = vcmp.lt.s32.totalorder %v253, 7
        %v315 = vsel %vm314, %v312, %v313
        %v316 = vsel %vm314, %v313, %v312
        %v317 = vmul.f32 %v291, %v315
        %v318 = vmul.f32 %v292, %v316
        %v319 = vadd.f32 %v310, %v317
        %v320 = vadd.f32 %v311, %v318
        %321 = vrot.lane.b32.xlu0 %v319, 1
        %v322 = vpop.permute.xlu0 %321
        %323 = vrot.lane.b32.xlu0 %v320, 1
        %v324 = vpop.permute.xlu0 %323
        %v325 = vmul.f32 %v295, %v322
        %v326 = vmul.f32 %v295, %v324
        %v327 = vadd.f32 %v319, %v325
        %v328 = vadd.f32 %v320, %v326
        %329 = vrot.lane.b32.xlu0 %v319, 127
        %v330 = vpop.permute.xlu0 %329
        %331 = vrot.lane.b32.xlu0 %v320, 127
        %v332 = vpop.permute.xlu0 %331
        %v333 = vmul.f32 %v298, %v330
        %v334 = vmul.f32 %v298, %v332
        %v335 = vadd.f32 %v327, %v333
        %v336 = vadd.f32 %v328, %v334
        %v337 = vmul.f32 %v335, %v301
        %v338 = vmul.f32 %v336, %v302
        %v339 = vmin.f32 %v218, %v337
        %v340 = vmin.f32 %v219, %v338
        %v341 = vrot.slane %v339, 7
        %v342 = vrot.slane %v340, 7
        %v343 = vsel %vm305, %v341, %v342
        %v344 = vsel %vm305, %v342, %v341
        %v345 = vmul.f32 %v285, %v344
        %v346 = vmul.f32 %v286, %v343
        %v347 = vadd.f32 %v339, %v345
        %v348 = vadd.f32 %v340, %v346
        %v349 = vrot.slane %v339, 1
        %v350 = vrot.slane %v340, 1
        %v351 = vsel %vm314, %v349, %v350
        %v352 = vsel %vm314, %v350, %v349
        %v353 = vmul.f32 %v291, %v351
        %v354 = vmul.f32 %v292, %v352
        %v355 = vadd.f32 %v347, %v353
        %v356 = vadd.f32 %v348, %v354
        %357 = vrot.lane.b32.xlu0 %v355, 1
        %v358 = vpop.permute.xlu0 %357
        %359 = vrot.lane.b32.xlu0 %v356, 1
        %v360 = vpop.permute.xlu0 %359
        %v361 = vmul.f32 %v295, %v358
        %v362 = vmul.f32 %v295, %v360
        %v363 = vadd.f32 %v355, %v361
        %v364 = vadd.f32 %v356, %v362
        %365 = vrot.lane.b32.xlu0 %v355, 127
        %v366 = vpop.permute.xlu0 %365
        %367 = vrot.lane.b32.xlu0 %v356, 127
        %v368 = vpop.permute.xlu0 %367
        %v369 = vmul.f32 %v298, %v366
        %v370 = vmul.f32 %v298, %v368
        %v371 = vadd.f32 %v363, %v369
        %v372 = vadd.f32 %v364, %v370
        %v373 = vmul.f32 %v371, %v301
        %v374 = vmul.f32 %v372, %v302
        %v375 = vmin.f32 %v339, %v373
        %v376 = vmin.f32 %v340, %v374
        %v377 = vrot.slane %v375, 7
        %v378 = vrot.slane %v376, 7
        %v379 = vsel %vm305, %v377, %v378
        %v380 = vsel %vm305, %v378, %v377
        %v381 = vmul.f32 %v285, %v380
        %v382 = vmul.f32 %v286, %v379
        %v383 = vadd.f32 %v375, %v381
        %v384 = vadd.f32 %v376, %v382
        %v385 = vrot.slane %v375, 1
        %v386 = vrot.slane %v376, 1
        %v387 = vsel %vm314, %v385, %v386
        %v388 = vsel %vm314, %v386, %v385
        %v389 = vmul.f32 %v291, %v387
        %v390 = vmul.f32 %v292, %v388
        %v391 = vadd.f32 %v383, %v389
        %v392 = vadd.f32 %v384, %v390
        %393 = vrot.lane.b32.xlu0 %v391, 1
        %v394 = vpop.permute.xlu0 %393
        %395 = vrot.lane.b32.xlu0 %v392, 1
        %v396 = vpop.permute.xlu0 %395
        %v397 = vmul.f32 %v295, %v394
        %v398 = vmul.f32 %v295, %v396
        %v399 = vadd.f32 %v391, %v397
        %v400 = vadd.f32 %v392, %v398
        %401 = vrot.lane.b32.xlu0 %v391, 127
        %v402 = vpop.permute.xlu0 %401
        %403 = vrot.lane.b32.xlu0 %v392, 127
        %v404 = vpop.permute.xlu0 %403
        %v405 = vmul.f32 %v298, %v402
        %v406 = vmul.f32 %v298, %v404
        %v407 = vadd.f32 %v399, %v405
        %v408 = vadd.f32 %v400, %v406
        %v409 = vmul.f32 %v407, %v301
        %v410 = vmul.f32 %v408, %v302
        %v411 = vmin.f32 %v375, %v409
        %v412 = vmin.f32 %v376, %v410
        %413 = vst [vmem:[%s214] sm:$0xff] %v411
        %414 = vst [vmem:[%s214 + $0x8] sm:$0xff] %v412
        %s415 = sand.u32 %s91, 1
        %s416 = scalar_lea.sflag [#allocation6], %s415
        %s417 = sand.u32 %s91, 1
        %s418 = smul.addr %s417, 16
        %s419 = scalar_lea.vmem [#allocation9], %s418
        // Predicated region
        $region37: #{tpu_custom_call.1} parent=27 // pred_check
          %p420 = pneg %p101
        $region38: #{tpu_custom_call.1} parent=27 // pred_check_branch
          %422 = sbr.rel (%p420) target = $region40
        $region39: #{tpu_custom_call.1} parent=27 // pred_region
          %s423 = smul.u32 2, %s31
          %425 = vsyncadd %s416, 0
          %s426 = smul.addr %s423, 8
          %s427 = scalar_lea.hbm %s3, %s426
          %s428 = sshll.u32 %s419, 4
          %s429 = int_to_ptr.vmem [resolvable:$true] %s428
          %s430 = sshll.u32 %s427, 4
          %s431 = int_to_ptr.hbm [resolvable:$true] %s430
          %436 = dma.vmem_to_hbm [thread:$0]  %s429, 256, %s431, %s416, 128, 128, 8
        $region40: #{tpu_custom_call.1} parent=27 // pred_fallthru
          _
      $region28: #{tpu_custom_call.1} parent=5 // pred_fallthru
        _
      %p437 = scmp.le.s32.totalorder 2, %s26
      // Predicated region
      $region41: #{tpu_custom_call.1} parent=5 // pred_check
        %p438 = pneg %p437
      $region42: #{tpu_custom_call.1} parent=5 // pred_check_branch
        %440 = sbr.rel (%p438) target = $region44
      $region43: #{tpu_custom_call.1} parent=5 // pred_region
        %s441 = ssub.s32 %s26, 2
        // Predicated region
        $region45: #{tpu_custom_call.1} parent=43 // pred_check
          %p442 = pneg %p107
        $region46: #{tpu_custom_call.1} parent=43 // pred_check_branch
          %444 = sbr.rel (%p442) target = $region48
        $region47: #{tpu_custom_call.1} parent=43 // pred_region
          %s445 = sand.u32 %s92, 1
          %s446 = scalar_lea.sflag [#allocation6], %s445
          %s447 = sand.u32 %s92, 1
          %s448 = smul.addr %s447, 16
          %s449 = scalar_lea.vmem [#allocation9], %s448
          %451 = dma.done %s446, 256
        $region48: #{tpu_custom_call.1} parent=43 // pred_fallthru
          _
      $region44: #{tpu_custom_call.1} parent=5 // pred_fallthru
        _
    $region6: #{tpu_custom_call.1} parent=1 // loop_footer
      %s30 = sadd.s32 1, %s26
    $region7: #{tpu_custom_call.1} parent=1 // loop_footer_branch
      %25 = sbr.rel target = $region3
    $region8: #{tpu_custom_call.1} parent=1 // loop_exit
      _
    %452 = vsyncpa [#allocation5], 1
    %s453 = scalar_lea.sflag [#allocation5], 1
    %454 = vsyncpa %s453, 1
    %455 = vsyncpa [#allocation8], 1
    %s456 = scalar_lea.sflag [#allocation8], 1
    %457 = vsyncpa %s456, 1
    %458 = vsyncpa [#allocation6], 1
    %s459 = scalar_lea.sflag [#allocation6], 1
    %460 = vsyncpa %s459, 1

</llo_original>
